<compile_context>
chip_gen: v6e
topology: v6e:2x2x1
jax: 0.10.0
libtpu: 0.0.40
codegen_flags: <defaults>
</compile_context>

<pallas_src>
import functools
import math

import jax
import jax.numpy as jnp
from jax.experimental import pallas as pl
from jax.experimental.pallas import tpu as pltpu


# ----------------------------- kernel bodies ------------------------------ #

def _softmax_and_outputs(scores, v, ctx_ref, attn_ref):
    """Stable softmax along the last axis, then write attn + ctx tiles."""
    m = jnp.max(scores, axis=-1, keepdims=True)
    e = jnp.exp(scores - m)
    denom = jnp.sum(e, axis=-1, keepdims=True)
    inv = pl.reciprocal(denom, approx=True)
    inv = inv * (2.0 - denom * inv)          # one Newton step -> ~full f32 precision
    p = e * inv
    attn_ref[...] = p.astype(attn_ref.dtype)
    ctx_ref[...] = jnp.einsum(
        "gqk,gkd->gqd", p.astype(v.dtype), v,
        preferred_element_type=jnp.float32).astype(ctx_ref.dtype)


def _sdpa_kernel(q_ref, k_ref, v_ref, ctx_ref, attn_ref, *, scale):
    q = q_ref[...] * scale                   # fold 1/sqrt(d_k) into Q (G*TQ*d_k muls)
    scores = jnp.einsum(                     # contract last dims; no k.T transpose
        "gqd,gkd->gqk", q, k_ref[...], preferred_element_type=jnp.float32)
    _softmax_and_outputs(scores, v_ref[...], ctx_ref, attn_ref)


def _sdpa_kernel_masked(q_ref, k_ref, v_ref, m_ref, ctx_ref, attn_ref, *, scale):
    q = q_ref[...] * scale
    scores = jnp.einsum(
        "gqd,gkd->gqk", q, k_ref[...], preferred_element_type=jnp.float32)
    # masked_fill_(mask, -1e9): nonzero mask entries -> -1e9.  m_ref block is
    # either (G, TQ, S) (per-head mask) or (1, TQ, S) (mask shared over heads).
    scores = jnp.where(m_ref[...] != 0, jnp.float32(-1000000000.0), scores)
    _softmax_and_outputs(scores, v_ref[...], ctx_ref, attn_ref)


# ----------------------------- tiling helpers ------------------------------ #

def _choose_tq(S):
    """Query-tile size: full S if small, otherwise a lane/sublane friendly divisor."""
    if S <= 256:
        return S
    for tq in (256, 128, 64, 32):
        if S % tq == 0:
            return tq
    return S


def _estimate_vmem_bytes(G, TQ, S, d_k, d_v, itemsize=4):
    q_b = G * TQ * d_k * itemsize
    k_b = G * S * d_k * itemsize
    v_b = G * S * d_v * itemsize
    attn_b = G * TQ * S * itemsize
    ctx_b = G * TQ * d_v * itemsize
    mask_b = G * TQ * S                      # int8
    io = 2 * (q_b + k_b + v_b + attn_b + ctx_b + mask_b)   # double-buffered windows
    temps = 4 * G * TQ * S * itemsize                       # scores / exp / prob temps
    return io + temps


def _choose_group(BH, TQ, S, d_k, d_v, budget_bytes=20 << 20):
    """Heads per grid step: largest divisor of BH (<=8) that fits the VMEM budget,
    preferring one that leaves an even number of head-group steps (v7x 2 TCs)."""
    divisors = [g for g in range(1, min(BH, 8) + 1) if BH % g == 0]
    feasible = [g for g in divisors
                if _estimate_vmem_bytes(g, TQ, S, d_k, d_v) <= budget_bytes] or [1]
    even_split = [g for g in feasible if (BH // g) % 2 == 0]
    return max(even_split) if even_split else max(feasible)


# ------------------------------- module wrapper ---------------------------- #

class ScaledDotProductAttention:
    """Pallas-TPU implementation of nlpblock ScaledDotProductAttention."""

    def __init__(self, d_model, d_k, d_v, n_heads):
        self.d_model = d_model
        self.d_k = d_k
        self.d_v = d_v
        self.n_heads = n_heads

    def __call__(self, Q, K, V, attn_mask=None):
        B, H, S, d_k = Q.shape
        d_v = V.shape[-1]
        assert d_k == self.d_k and d_v == self.d_v and H == self.n_heads

        BH = B * H
        q = Q.reshape(BH, S, d_k)
        k = K.reshape(BH, S, d_k)
        v = V.reshape(BH, S, d_v)
        scale = 1.0 / math.sqrt(self.d_k)

        TQ = _choose_tq(S)
        G = _choose_group(BH, TQ, S, d_k, d_v)
        grid = (BH // G, S // TQ)

        est = _estimate_vmem_bytes(G, TQ, S, d_k, d_v)
        vmem_limit = int(min(max(2 * est, 24 << 20), 48 << 20))
        compiler_params = pltpu.CompilerParams(
            dimension_semantics=("parallel", "parallel"),
            vmem_limit_bytes=vmem_limit)

        qkv_specs = [
            pl.BlockSpec((G, TQ, d_k), lambda h, t: (h, t, 0)),   # Q: stream tiles
            pl.BlockSpec((G, S, d_k), lambda h, t: (h, 0, 0)),    # K: resident per head group
            pl.BlockSpec((G, S, d_v), lambda h, t: (h, 0, 0)),    # V: resident per head group
        ]
        out_shapes = (
            jax.ShapeDtypeStruct((BH, S, d_v), Q.dtype),
            jax.ShapeDtypeStruct((BH, S, S), Q.dtype),
        )
        out_specs = (
            pl.BlockSpec((G, TQ, d_v), lambda h, t: (h, t, 0)),
            pl.BlockSpec((G, TQ, S), lambda h, t: (h, t, 0)),
        )

        if attn_mask is None:
            kernel = functools.partial(_sdpa_kernel, scale=scale)
            ctx, attn = pl.pallas_call(
                kernel,
                out_shape=out_shapes,
                grid=grid,
                in_specs=qkv_specs,
                out_specs=out_specs,
                compiler_params=compiler_params,
            )(q, k, v)
        else:
            m = jnp.asarray(attn_mask)
            while m.ndim < 4:
                m = m[None]
            shared = (m.shape[0] == 1 and m.shape[1] == 1)
            if shared:
                # One (1, S, S) int8 slab reused for every head group.
                mask = jnp.broadcast_to(m, (1, 1, S, S)).reshape(1, S, S).astype(jnp.int8)
                mask_spec = pl.BlockSpec((1, TQ, S), lambda h, t: (0, t, 0))
            else:
                mask = jnp.broadcast_to(m, (B, H, S, S)).reshape(BH, S, S).astype(jnp.int8)
                mask_spec = pl.BlockSpec((G, TQ, S), lambda h, t: (h, t, 0))

            kernel = functools.partial(_sdpa_kernel_masked, scale=scale)
            ctx, attn = pl.pallas_call(
                kernel,
                out_shape=out_shapes,
                grid=grid,
                in_specs=qkv_specs + [mask_spec],
                out_specs=out_specs,
                compiler_params=compiler_params,
            )(q, k, v, mask)

        context_vector = ctx.reshape(B, H, S, d_v)
        attn_softmax_vector = attn.reshape(B, H, S, S)
        return context_vector, attn_softmax_vector


# --------------------------------- test ------------------------------------ #

def _reference(Q, K, V, d_k, attn_mask=None):
    scores = jnp.einsum("bhqd,bhkd->bhqk", Q, K) / math.sqrt(d_k)
    if attn_mask is not None:
        scores = jnp.where(attn_mask, -1000000000.0, scores)
    p = jax.nn.softmax(scores, axis=-1)
    ctx = jnp.einsum("bhqk,bhkd->bhqd", p, V)
    return ctx, p


if __name__ == "__main__":
    d_model, d_k, d_v, n_heads = 64, 32, 32, 2
    B, S = 2, 8

    key = jax.random.PRNGKey(0)
    kq, kk, kv = jax.random.split(key, 3)
    Q = jax.random.normal(kq, (B, n_heads, S, d_k), dtype=jnp.float32)
    K = jax.random.normal(kk, (B, n_heads, S, d_k), dtype=jnp.float32)
    V = jax.random.normal(kv, (B, n_heads, S, d_v), dtype=jnp.float32)

    causal = jnp.triu(jnp.ones((S, S), dtype=bool), k=1)   # True => masked out
    shared_mask = causal[None, None]                       # (1, 1, S, S), shared
    full_mask = jnp.broadcast_to(causal, (B, n_heads, S, S))

    sdpa = ScaledDotProductAttention(d_model, d_k, d_v, n_heads)

    ctx0, attn0 = sdpa(Q, K, V)                 # no-mask path
    ctx1, attn1 = sdpa(Q, K, V, shared_mask)    # broadcast (shared) mask path
    ctx2, attn2 = sdpa(Q, K, V, full_mask)      # per-head mask path
    jax.block_until_ready((ctx0, attn0, ctx1, attn1, ctx2, attn2))

    ref_ctx0, ref_attn0 = _reference(Q, K, V, d_k)
    ref_ctx1, ref_attn1 = _reference(Q, K, V, d_k, full_mask)

    assert jnp.allclose(ctx0, ref_ctx0, atol=1e-5, rtol=1e-5)
    assert jnp.allclose(attn0, ref_attn0, atol=1e-5, rtol=1e-5)
    assert jnp.allclose(ctx1, ref_ctx1, atol=1e-5, rtol=1e-5)
    assert jnp.allclose(attn1, ref_attn1, atol=1e-5, rtol=1e-5)
    assert jnp.allclose(ctx2, ref_ctx1, atol=1e-5, rtol=1e-5)
    assert jnp.allclose(attn2, ref_attn1, atol=1e-5, rtol=1e-5)

    print("KERNEL_OK")
</pallas_src>

<mosaic_0001>
module attributes {stable_mosaic.version = 11 : i64} {
  func.func @_sdpa_kernel(%arg0: i32, %arg1: i32, %arg2: memref<2x8x32xf32, #tpu.memory_space<vmem>>, %arg3: memref<2x8x32xf32, #tpu.memory_space<vmem>>, %arg4: memref<2x8x32xf32, #tpu.memory_space<vmem>>, %arg5: memref<2x8x32xf32, #tpu.memory_space<vmem>>, %arg6: memref<2x8x8xf32, #tpu.memory_space<vmem>>) attributes {dimension_semantics = [#tpu.dimension_semantics<parallel>, #tpu.dimension_semantics<parallel>], iteration_bounds = array<i64: 2, 1>, scalar_prefetch = 0 : i64, scratch_operands = 0 : i64, tpu.core_type = #tpu.core_type<tc>, window_params = [{transform_indices = @transform_0, window_bounds = array<i64: 2, 8, 32>}, {transform_indices = @transform_1, window_bounds = array<i64: 2, 8, 32>}, {transform_indices = @transform_2, window_bounds = array<i64: 2, 8, 32>}, {transform_indices = @transform_3, window_bounds = array<i64: 2, 8, 32>}, {transform_indices = @transform_4, window_bounds = array<i64: 2, 8, 8>}]} {
    %c0 = arith.constant 0 : index
    %c0_0 = arith.constant 0 : index
    %c0_1 = arith.constant 0 : index
    %0 = vector.load %arg2[%c0, %c0_0, %c0_1] : memref<2x8x32xf32, #tpu.memory_space<vmem>>, vector<2x8x32xf32>
    %cst = arith.constant 0.176776692 : f32
    %1 = vector.broadcast %cst : f32 to vector<2x8x32xf32>
    %2 = arith.mulf %0, %1 : vector<2x8x32xf32>
    %c0_2 = arith.constant 0 : index
    %c0_3 = arith.constant 0 : index
    %c0_4 = arith.constant 0 : index
    %3 = vector.load %arg3[%c0_2, %c0_3, %c0_4] : memref<2x8x32xf32, #tpu.memory_space<vmem>>, vector<2x8x32xf32>
    "tpu.trace_start"() <{level = 10 : i32, message = "gqd,gkd->gqk"}> : () -> ()
    %cst_5 = arith.constant dense<0.000000e+00> : vector<2x8x8xf32>
    %4 = tpu.matmul %2, %3, %cst_5 {dimension_numbers = #tpu.dot_dimension_numbers<[2], [2], [1], [1], [0, 0, 0, 1, 1, 1], [0], [0]>} : vector<2x8x32xf32>, vector<2x8x32xf32>, vector<2x8x8xf32> -> vector<2x8x8xf32>
    "tpu.trace_stop"() : () -> ()
    %c0_6 = arith.constant 0 : index
    %c0_7 = arith.constant 0 : index
    %c0_8 = arith.constant 0 : index
    %5 = vector.load %arg4[%c0_6, %c0_7, %c0_8] : memref<2x8x32xf32, #tpu.memory_space<vmem>>, vector<2x8x32xf32>
    %cst_9 = arith.constant dense<0xFF800000> : vector<2x8xf32>
    %6 = vector.multi_reduction <maximumf>, %4, %cst_9 [2] : vector<2x8x8xf32> to vector<2x8xf32>
    %7 = vector.shape_cast %6 : vector<2x8xf32> to vector<2x8x1xf32>
    %8 = vector.broadcast %7 : vector<2x8x1xf32> to vector<2x8x8xf32>
    %9 = arith.subf %4, %8 : vector<2x8x8xf32>
    %10 = math.exp %9 : vector<2x8x8xf32>
    %cst_10 = arith.constant dense<0.000000e+00> : vector<2x8xf32>
    %11 = vector.multi_reduction <add>, %10, %cst_10 [2] : vector<2x8x8xf32> to vector<2x8xf32>
    %12 = vector.shape_cast %11 : vector<2x8xf32> to vector<2x8x1xf32>
    %13 = tpu.reciprocal %12 {approx = true} : vector<2x8x1xf32> -> vector<2x8x1xf32>
    %14 = arith.mulf %12, %13 : vector<2x8x1xf32>
    %cst_11 = arith.constant 2.000000e+00 : f32
    %15 = vector.broadcast %cst_11 : f32 to vector<2x8x1xf32>
    %16 = arith.subf %15, %14 : vector<2x8x1xf32>
    %17 = arith.mulf %13, %16 : vector<2x8x1xf32>
    %18 = vector.broadcast %17 : vector<2x8x1xf32> to vector<2x8x8xf32>
    %19 = arith.mulf %10, %18 : vector<2x8x8xf32>
    %c0_12 = arith.constant 0 : index
    %c0_13 = arith.constant 0 : index
    %c0_14 = arith.constant 0 : index
    %20 = vector.load %arg6[%c0_12, %c0_13, %c0_14] : memref<2x8x8xf32, #tpu.memory_space<vmem>>, vector<2x8x8xf32>
    tpu.vector_store %arg6[%c0_12, %c0_13, %c0_14], %19 {strides = array<i32>} : memref<2x8x8xf32, #tpu.memory_space<vmem>>, vector<2x8x8xf32>,
    "tpu.trace_start"() <{level = 10 : i32, message = "gqk,gkd->gqd"}> : () -> ()
    %cst_15 = arith.constant dense<0.000000e+00> : vector<2x8x32xf32>
    %21 = tpu.matmul %19, %5, %cst_15 {dimension_numbers = #tpu.dot_dimension_numbers<[2], [1], [1], [2], [0, 0, 0, 1, 1, 2], [0], [0]>} : vector<2x8x8xf32>, vector<2x8x32xf32>, vector<2x8x32xf32> -> vector<2x8x32xf32>
    "tpu.trace_stop"() : () -> ()
    %c0_16 = arith.constant 0 : index
    %c0_17 = arith.constant 0 : index
    %c0_18 = arith.constant 0 : index
    %22 = vector.load %arg5[%c0_16, %c0_17, %c0_18] : memref<2x8x32xf32, #tpu.memory_space<vmem>>, vector<2x8x32xf32>
    tpu.vector_store %arg5[%c0_16, %c0_17, %c0_18], %21 {strides = array<i32>} : memref<2x8x32xf32, #tpu.memory_space<vmem>>, vector<2x8x32xf32>,
    return
  }
  func.func @transform_0(%arg0: i32, %arg1: i32) -> (i32, i32, i32) {
    %c0_i32 = arith.constant 0 : i32
    %c0_i32_0 = arith.constant 0 : i32
    return %arg0, %arg1, %c0_i32 : i32, i32, i32
  }
  func.func @transform_1(%arg0: i32, %arg1: i32) -> (i32, i32, i32) {
    %c0_i32 = arith.constant 0 : i32
    %c0_i32_0 = arith.constant 0 : i32
    %c0_i32_1 = arith.constant 0 : i32
    return %arg0, %c0_i32, %c0_i32_0 : i32, i32, i32
  }
  func.func @transform_2(%arg0: i32, %arg1: i32) -> (i32, i32, i32) {
    %c0_i32 = arith.constant 0 : i32
    %c0_i32_0 = arith.constant 0 : i32
    %c0_i32_1 = arith.constant 0 : i32
    return %arg0, %c0_i32, %c0_i32_0 : i32, i32, i32
  }
  func.func @transform_3(%arg0: i32, %arg1: i32) -> (i32, i32, i32) {
    %c0_i32 = arith.constant 0 : i32
    %c0_i32_0 = arith.constant 0 : i32
    return %arg0, %arg1, %c0_i32 : i32, i32, i32
  }
  func.func @transform_4(%arg0: i32, %arg1: i32) -> (i32, i32, i32) {
    %c0_i32 = arith.constant 0 : i32
    %c0_i32_0 = arith.constant 0 : i32
    return %arg0, %arg1, %c0_i32 : i32, i32, i32
  }
}

</mosaic_0001>

<llo_original>
// kernel: tpu_custom_call.1
$region0: #{tpu_custom_call.1}
  #allocation0 [shape = 'u32[]', space=smem, size = 0x4, offset = 0x4, fixed_abs, tag = 'smem constant byte address 0x4 - core index']
  #allocation1 [shape = 'u32[144,128]{1,0:T(1,128)}', space=vmem, size = 0x12000, scoped, tag = 'internal scratch']
  %s0 = inlined_call_operand.hbm [shape: f32[4,8,32], index: 0, kind: input, shape index: {}]
  %s1 = inlined_call_operand.hbm [shape: f32[4,8,32], index: 1, kind: input, shape index: {}]
  %s2 = inlined_call_operand.hbm [shape: f32[4,8,32], index: 2, kind: input, shape index: {}]
  %s3 = inlined_call_operand.hbm [shape: f32[4,8,32], index: 3, kind: output, shape index: {0}]
  %s4 = inlined_call_operand.hbm [shape: f32[4,8,8], index: 4, kind: output, shape index: {1}]
  %5 = xla_tuple %s3, %s4
  %s6 = sld [smem:[#allocation0]]
  $region65: #{tpu_custom_call.1} parent=0
    _
  %s8 = ssub.s32 1, %s6
  %s9 = scalar_select 0, %s8, %s6
  $region1: #{tpu_custom_call.1} parent=0
    #allocation2 [shape = 'u8[16384]{0}', space=vmem, size = 0x4000, scoped, tag = 'input window, operand 0']
    #allocation3 [shape = 's32[2]{0}', space=sflag, size = 0x8, scoped, tag = 'scoped memory for tpu_custom_call.1']
    #allocation4 [shape = 's32[2]{0}', space=sflag, size = 0x8, scoped, tag = 'scoped memory for tpu_custom_call.1']
    #allocation5 [shape = 'u8[16384]{0}', space=vmem, size = 0x4000, scoped, tag = 'input window, operand 1']
    #allocation6 [shape = 's32[2]{0}', space=sflag, size = 0x8, scoped, tag = 'scoped memory for tpu_custom_call.1']
    #allocation7 [shape = 'u8[16384]{0}', space=vmem, size = 0x4000, scoped, tag = 'input window, operand 2']
    #allocation8 [shape = 'u8[16384]{0}', space=vmem, size = 0x4000, scoped, tag = 'output window, operand 0']
    #allocation9 [shape = 'u8[16384]{0}', space=vmem, size = 0x4000, scoped, tag = 'output window, operand 1']
    #allocation10 [shape = 's32[2]{0}', space=sflag, size = 0x8, scoped, tag = 'scoped memory for tpu_custom_call.1']
    %10 = vsyncpa [#allocation3], 0
    %s11 = scalar_lea.sflag [#allocation3], 1
    %12 = vsyncpa %s11, 0
    %13 = vsyncpa [#allocation6], 0
    %s14 = scalar_lea.sflag [#allocation6], 1
    %15 = vsyncpa %s14, 0
    %16 = vsyncpa [#allocation4], 0
    %s17 = scalar_lea.sflag [#allocation4], 1
    %18 = vsyncpa %s17, 0
    %19 = vsyncpa [#allocation10], 0
    %s20 = scalar_lea.sflag [#allocation10], 1
    %21 = vsyncpa %s20, 0
    loop: start=0, step=1, limit=4
    $region2: #{tpu_custom_call.1} parent=1 // loop_pre_header
      _
    $region3: #{tpu_custom_call.1} parent=1 // loop_header
      %s23 = sphi 0, %s27
      %p24 = scmp.ge.s32.totalorder %s23, 4
      %s30 = sphi 0, %s42
      %s31 = sphi 0, %s38
      %s32 = sphi 0, %s30
      %s33 = sphi 0, %s31
      %s34 = sphi 0, %s32
      %s35 = sphi 0, %s33
      %s47 = sphi 0, %s49
      %s50 = sphi 0, %s47
      %s51 = sphi 0, %s50
      %s67 = sphi 0, %s51
      %s73 = sphi 0, %s75
      %s76 = sphi 0, %s73
      %s77 = sphi 0, %s76
      %s93 = sphi 0, %s77
      %s99 = sphi 0, %s101
      %s102 = sphi 0, %s99
      %s103 = sphi 0, %s102
      %s119 = sphi 0, %s103
      %s127 = sphi 0, %s129
      %s130 = sphi 0, %s127
      %s131 = sphi 0, %s130
      %s147 = sphi 0, %s131
      %s155 = sphi 0, %s157
      %s158 = sphi 0, %s155
      %s159 = sphi 0, %s158
      %s175 = sphi 0, %s159
    $region4: #{tpu_custom_call.1} parent=1 // loop_header_branch
      %26 = sbr.rel (%p24) target = $region8
    $region5: #{tpu_custom_call.1} parent=1 // loop_body
      %s28 = ssub.s32 %s23, 1
      %s29 = ssub.s32 %s23, 2
      %s36 = sadd.s32 1, %s31
      %p37 = scmp.ge.s32.totalorder %s36, 1
      %s38 = scalar_select %p37, 0, %s36
      %s39 = sadd.s32 1, %s30
      %s40 = scalar_select %p37, %s39, %s30
      %p41 = scmp.ge.s32.totalorder %s40, 2
      %s42 = scalar_select %p41, 0, %s40
      %s43 = ssub.s32 %s30, %s42
      %s44 = ssub.s32 %s31, %s38
      %s45 = sor.u32 %s43, %s44
      %p46 = scmp.eq.s32.totalorder %s45, 0
      %s48 = sadd.s32 %s47, 1
      %s49 = scalar_select %p46, %s47, %s48
      %p52 = pneg %p46
      %p53 = scmp.eq.s32.totalorder %s23, 1
      %p54 = por %p52, %p53
      %p55 = scmp.ne.s32.totalorder %s47, %s50
      %p56 = scmp.eq.s32.totalorder %s23, 0
      %p57 = por %p55, %p56
      %p58 = scmp.ne.s32.totalorder %s47, %s50
      %p59 = scmp.eq.s32.totalorder %s28, 1
      %p60 = por %p58, %p59
      %p61 = scmp.ne.s32.totalorder %s50, %s51
      %p62 = scmp.eq.s32.totalorder %s28, 0
      %p63 = por %p61, %p62
      %p64 = scmp.ne.s32.totalorder %s50, %s51
      %p65 = scmp.eq.s32.totalorder %s29, 1
      %p66 = por %p64, %p65
      %p68 = scmp.ne.s32.totalorder %s51, %s67
      %p69 = scmp.eq.s32.totalorder %s29, 0
      %p70 = por %p68, %p69
      %s71 = ssub.s32 %s30, %s42
      %p72 = scmp.eq.s32.totalorder %s71, 0
      %s74 = sadd.s32 %s73, 1
      %s75 = scalar_select %p72, %s73, %s74
      %p78 = pneg %p72
      %p79 = scmp.eq.s32.totalorder %s23, 1
      %p80 = por %p78, %p79
      %p81 = scmp.ne.s32.totalorder %s73, %s76
      %p82 = scmp.eq.s32.totalorder %s23, 0
      %p83 = por %p81, %p82
      %p84 = scmp.ne.s32.totalorder %s73, %s76
      %p85 = scmp.eq.s32.totalorder %s28, 1
      %p86 = por %p84, %p85
      %p87 = scmp.ne.s32.totalorder %s76, %s77
      %p88 = scmp.eq.s32.totalorder %s28, 0
      %p89 = por %p87, %p88
      %p90 = scmp.ne.s32.totalorder %s76, %s77
      %p91 = scmp.eq.s32.totalorder %s29, 1
      %p92 = por %p90, %p91
      %p94 = scmp.ne.s32.totalorder %s77, %s93
      %p95 = scmp.eq.s32.totalorder %s29, 0
      %p96 = por %p94, %p95
      %s97 = ssub.s32 %s30, %s42
      %p98 = scmp.eq.s32.totalorder %s97, 0
      %s100 = sadd.s32 %s99, 1
      %s101 = scalar_select %p98, %s99, %s100
      %p104 = pneg %p98
      %p105 = scmp.eq.s32.totalorder %s23, 1
      %p106 = por %p104, %p105
      %p107 = scmp.ne.s32.totalorder %s99, %s102
      %p108 = scmp.eq.s32.totalorder %s23, 0
      %p109 = por %p107, %p108
      %p110 = scmp.ne.s32.totalorder %s99, %s102
      %p111 = scmp.eq.s32.totalorder %s28, 1
      %p112 = por %p110, %p111
      %p113 = scmp.ne.s32.totalorder %s102, %s103
      %p114 = scmp.eq.s32.totalorder %s28, 0
      %p115 = por %p113, %p114
      %p116 = scmp.ne.s32.totalorder %s102, %s103
      %p117 = scmp.eq.s32.totalorder %s29, 1
      %p118 = por %p116, %p117
      %p120 = scmp.ne.s32.totalorder %s103, %s119
      %p121 = scmp.eq.s32.totalorder %s29, 0
      %p122 = por %p120, %p121
      %s123 = ssub.s32 %s30, %s42
      %s124 = ssub.s32 %s31, %s38
      %s125 = sor.u32 %s123, %s124
      %p126 = scmp.eq.s32.totalorder %s125, 0
      %s128 = sadd.s32 %s127, 1
      %s129 = scalar_select %p126, %s127, %s128
      %p132 = pneg %p126
      %p133 = scmp.eq.s32.totalorder %s23, 1
      %p134 = por %p132, %p133
      %p135 = scmp.ne.s32.totalorder %s127, %s130
      %p136 = scmp.eq.s32.totalorder %s23, 0
      %p137 = por %p135, %p136
      %p138 = scmp.ne.s32.totalorder %s127, %s130
      %p139 = scmp.eq.s32.totalorder %s28, 1
      %p140 = por %p138, %p139
      %p141 = scmp.ne.s32.totalorder %s130, %s131
      %p142 = scmp.eq.s32.totalorder %s28, 0
      %p143 = por %p141, %p142
      %p144 = scmp.ne.s32.totalorder %s130, %s131
      %p145 = scmp.eq.s32.totalorder %s29, 1
      %p146 = por %p144, %p145
      %p148 = scmp.ne.s32.totalorder %s131, %s147
      %p149 = scmp.eq.s32.totalorder %s29, 0
      %p150 = por %p148, %p149
      %s151 = ssub.s32 %s30, %s42
      %s152 = ssub.s32 %s31, %s38
      %s153 = sor.u32 %s151, %s152
      %p154 = scmp.eq.s32.totalorder %s153, 0
      %s156 = sadd.s32 %s155, 1
      %s157 = scalar_select %p154, %s155, %s156
      %p160 = pneg %p154
      %p161 = scmp.eq.s32.totalorder %s23, 1
      %p162 = por %p160, %p161
      %p163 = scmp.ne.s32.totalorder %s155, %s158
      %p164 = scmp.eq.s32.totalorder %s23, 0
      %p165 = por %p163, %p164
      %p166 = scmp.ne.s32.totalorder %s155, %s158
      %p167 = scmp.eq.s32.totalorder %s28, 1
      %p168 = por %p166, %p167
      %p169 = scmp.ne.s32.totalorder %s158, %s159
      %p170 = scmp.eq.s32.totalorder %s28, 0
      %p171 = por %p169, %p170
      %p172 = scmp.ne.s32.totalorder %s158, %s159
      %p173 = scmp.eq.s32.totalorder %s29, 1
      %p174 = por %p172, %p173
      %p176 = scmp.ne.s32.totalorder %s159, %s175
      %p177 = scmp.eq.s32.totalorder %s29, 0
      %p178 = por %p176, %p177
      %p179 = scmp.le.s32.totalorder 1, %s23
      %p180 = scmp.lt.s32.totalorder %s23, 3
      %p181 = pnand %p179, %p180
      %p182 = pneg %p181
      // Predicated region
      $region9: #{tpu_custom_call.1} parent=5 // pred_check
        _
      $region10: #{tpu_custom_call.1} parent=5 // pred_check_branch
        %184 = sbr.rel (%p181) target = $region12
      $region11: #{tpu_custom_call.1} parent=5 // pred_region
        %s185 = ssub.s32 %s23, 1
      $region12: #{tpu_custom_call.1} parent=5 // pred_fallthru
        _
      %p186 = scmp.lt.s32.totalorder %s23, 2
      // Predicated region
      $region13: #{tpu_custom_call.1} parent=5 // pred_check
        %p187 = pneg %p186
      $region14: #{tpu_custom_call.1} parent=5 // pred_check_branch
        %189 = sbr.rel (%p187) target = $region16
      $region15: #{tpu_custom_call.1} parent=5 // pred_region
        // Predicated region
        $region17: #{tpu_custom_call.1} parent=15 // pred_check
          %p190 = pneg %p57
        $region18: #{tpu_custom_call.1} parent=15 // pred_check_branch
          %192 = sbr.rel (%p190) target = $region20
        $region19: #{tpu_custom_call.1} parent=15 // pred_region
          %s193 = sand.u32 %s47, 1
          %s194 = scalar_lea.sflag [#allocation3], %s193
          %s195 = sand.u32 %s47, 1
          %s196 = smul.addr %s195, 16
          %s197 = scalar_lea.vmem [#allocation2], %s196
          %s198 = smul.u32 2, %s30
          %s200 = ssub.s32 256, 256
          %201 = vsyncadd %s194, %s200
          %s202 = sadd.s32 %s31, %s198
          %s203 = smul.addr %s202, 128
          %s204 = scalar_lea.hbm %s0, %s203
          %s205 = sshll.u32 %s197, 4
          %s206 = int_to_ptr.vmem [resolvable:$true] %s205
          %211 = dma.hbm_to_vmem [thread:$0]  %s204, 256, %s206, %s194, 128, 128, 8
        $region20: #{tpu_custom_call.1} parent=15 // pred_fallthru
          _
        // Predicated region
        $region21: #{tpu_custom_call.1} parent=15 // pred_check
          %p212 = pneg %p83
        $region22: #{tpu_custom_call.1} parent=15 // pred_check_branch
          %214 = sbr.rel (%p212) target = $region24
        $region23: #{tpu_custom_call.1} parent=15 // pred_region
          %s215 = sand.u32 %s23, 1
          %s216 = scalar_lea.sflag [#allocation6], %s215
          %s217 = sand.u32 %s73, 1
          %s218 = smul.addr %s217, 16
          %s219 = scalar_lea.vmem [#allocation5], %s218
          %s220 = smul.u32 2, %s30
          %s222 = ssub.s32 256, 256
          %223 = vsyncadd %s216, %s222
          %s224 = smul.addr %s220, 128
          %s225 = scalar_lea.hbm %s1, %s224
          %s226 = sshll.u32 %s219, 4
          %s227 = int_to_ptr.vmem [resolvable:$true] %s226
          %232 = dma.hbm_to_vmem [thread:$0]  %s225, 256, %s227, %s216, 128, 128, 8
        $region24: #{tpu_custom_call.1} parent=15 // pred_fallthru
          _
        // Predicated region
        $region25: #{tpu_custom_call.1} parent=15 // pred_check
          %p233 = pneg %p109
        $region26: #{tpu_custom_call.1} parent=15 // pred_check_branch
          %235 = sbr.rel (%p233) target = $region28
        $region27: #{tpu_custom_call.1} parent=15 // pred_region
          %s236 = sand.u32 %s23, 1
          %s237 = scalar_lea.sflag [#allocation6], %s236
          %s238 = sand.u32 %s99, 1
          %s239 = smul.addr %s238, 16
          %s240 = scalar_lea.vmem [#allocation7], %s239
          %s241 = smul.u32 2, %s30
          %s243 = ssub.s32 256, 256
          %244 = vsyncadd %s237, %s243
          %s245 = smul.addr %s241, 128
          %s246 = scalar_lea.hbm %s2, %s245
          %s247 = sshll.u32 %s240, 4
          %s248 = int_to_ptr.vmem [resolvable:$true] %s247
          %253 = dma.hbm_to_vmem [thread:$0]  %s246, 256, %s248, %s237, 128, 128, 8
        $region28: #{tpu_custom_call.1} parent=15 // pred_fallthru
          _
      $region16: #{tpu_custom_call.1} parent=5 // pred_fallthru
        _
      %p254 = scmp.le.s32.totalorder 1, %s23
      %p255 = scmp.lt.s32.totalorder %s23, 3
      %p256 = pnand %p254, %p255
      %p257 = pneg %p256
      // Predicated region
      $region29: #{tpu_custom_call.1} parent=5 // pred_check
        _
      $region30: #{tpu_custom_call.1} parent=5 // pred_check_branch
        %259 = sbr.rel (%p256) target = $region32
      $region31: #{tpu_custom_call.1} parent=5 // pred_region
        %s260 = ssub.s32 %s23, 1
        %s261 = sand.u32 %s50, 1
        %s262 = scalar_lea.sflag [#allocation3], %s261
        %s263 = sand.u32 %s50, 1
        %s264 = smul.addr %s263, 16
        %s265 = scalar_lea.vmem [#allocation2], %s264
        // Predicated region
        $region33: #{tpu_custom_call.1} parent=31 // pred_check
          %p266 = pneg %p63
        $region34: #{tpu_custom_call.1} parent=31 // pred_check_branch
          %268 = sbr.rel (%p266) target = $region36
        $region35: #{tpu_custom_call.1} parent=31 // pred_region
          %269 = dma.done %s262, 256
        $region36: #{tpu_custom_call.1} parent=31 // pred_fallthru
          _
        %s270 = sand.u32 %s28, 1
        %s271 = scalar_lea.sflag [#allocation6], %s270
        %s272 = sand.u32 %s76, 1
        %s273 = smul.addr %s272, 16
        %s274 = scalar_lea.vmem [#allocation5], %s273
        // Predicated region
        $region37: #{tpu_custom_call.1} parent=31 // pred_check
          %p275 = pneg %p89
        $region38: #{tpu_custom_call.1} parent=31 // pred_check_branch
          %277 = sbr.rel (%p275) target = $region40
        $region39: #{tpu_custom_call.1} parent=31 // pred_region
          %278 = dma.done %s271, 256
        $region40: #{tpu_custom_call.1} parent=31 // pred_fallthru
          _
        %s279 = sand.u32 %s28, 1
        %s280 = scalar_lea.sflag [#allocation6], %s279
        %s281 = sand.u32 %s102, 1
        %s282 = smul.addr %s281, 16
        %s283 = scalar_lea.vmem [#allocation7], %s282
        // Predicated region
        $region41: #{tpu_custom_call.1} parent=31 // pred_check
          %p284 = pneg %p115
        $region42: #{tpu_custom_call.1} parent=31 // pred_check_branch
          %286 = sbr.rel (%p284) target = $region44
        $region43: #{tpu_custom_call.1} parent=31 // pred_region
          %287 = dma.done %s280, 256
        $region44: #{tpu_custom_call.1} parent=31 // pred_fallthru
          _
        %s288 = sand.u32 %s50, 1
        %s289 = scalar_lea.sflag [#allocation3], %s288
        %s290 = sand.u32 %s50, 1
        %s291 = smul.addr %s290, 16
        %s292 = scalar_lea.vmem [#allocation2], %s291
        %p293 = pneg %p63
        %p294 = pneg %p60
        %s295 = sand.u32 %s28, 1
        %s296 = scalar_lea.sflag [#allocation6], %s295
        %s297 = sand.u32 %s76, 1
        %s298 = smul.addr %s297, 16
        %s299 = scalar_lea.vmem [#allocation5], %s298
        %p300 = pneg %p89
        %p301 = pneg %p86
        %s302 = sand.u32 %s28, 1
        %s303 = scalar_lea.sflag [#allocation6], %s302
        %s304 = sand.u32 %s102, 1
        %s305 = smul.addr %s304, 16
        %s306 = scalar_lea.vmem [#allocation7], %s305
        %p307 = pneg %p115
        %p308 = pneg %p112
        %p309 = pneg %p143
        %p310 = pneg %p140
        %s311 = sand.u32 %s130, 1
        %s312 = scalar_lea.sflag [#allocation4], %s311
        %s313 = sand.u32 %s130, 1
        %s314 = smul.addr %s313, 16
        %s315 = scalar_lea.vmem [#allocation8], %s314
        %p316 = pneg %p171
        %p317 = pneg %p168
        %s318 = sand.u32 %s158, 1
        %s319 = scalar_lea.sflag [#allocation10], %s318
        %s320 = sand.u32 %s158, 1
        %s321 = smul.addr %s320, 16
        %s322 = scalar_lea.vmem [#allocation9], %s321
        %s323 = smul.u32 2, %s32
        %s324 = smul.u32 2, %s32
        %s325 = smul.u32 2, %s32
        %s326 = smul.u32 2, %s32
        %s327 = smul.u32 2, %s32
        %v328 = vld [vmem:[%s265] sm:$0xff]
        %v329 = vld [vmem:[%s265 + $0x8] sm:$0xff]
        %v330 = vmul.f32 %v328, 0.17677669
        %v331 = vmul.f32 %v329, 0.17677669
        %v332 = vld [vmem:[%s274] sm:$0xff]
        %v333 = vld [vmem:[%s274 + $0x8] sm:$0xff]
        %vm334 = vcmask 261120
        %v336 = vsel %vm334, %v330, 0
        %v339 = vsel %vm334, %v332, 0
        %341 = vmatprep.subr.mxu0 0.0
        %342 = vmatpush1.xpose.msra.mxu0 0.0
        %343 = vmatprep.subr.mxu0 0.0
        %344 = vmatpush1.xpose.msra.mxu0 0.0
        %345 = vmatprep.subr.mxu0 0.0
        %346 = vmatpush1.xpose.msra.mxu0 0.0
        %347 = vmatprep.subr.mxu0 0.0
        %348 = vmatpush1.xpose.msra.mxu0 0.0
        %349 = vmatprep.subr.mxu0 0.0
        %350 = vmatpush1.xpose.msra.mxu0 0.0
        %351 = vmatprep.subr.mxu0 0.0
        %352 = vmatpush1.xpose.msra.mxu0 0.0
        %353 = vmatprep.subr.mxu0 0.0
        %354 = vmatpush1.xpose.msra.mxu0 0.0
        %355 = vmatprep.subr.mxu0 0.0
        %356 = vmatpush1.xpose.msra.mxu0 0.0
        %357 = vmatprep.subr.mxu0 0.0
        %358 = vmatpush1.xpose.msra.mxu0 0.0
        %359 = vmatprep.subr.mxu0 0.0
        %360 = vmatpush1.xpose.msra.mxu0 0.0
        %361 = vmatprep.subr.mxu0 0.0
        %362 = vmatpush1.xpose.msra.mxu0 0.0
        %363 = vmatprep.subr.mxu0 0.0
        %364 = vmatpush1.xpose.msra.mxu0 0.0
        %365 = vmatprep.subr.mxu0 0.0
        %366 = vmatpush1.xpose.msra.mxu0 0.0
        %367 = vmatprep.subr.mxu0 0.0
        %368 = vmatpush1.xpose.msra.mxu0 0.0
        %369 = vmatprep.subr.mxu0 0.0
        %370 = vmatpush1.xpose.msra.mxu0 0.0
        %371 = vmatprep.subr.mxu0 0.0
        %372 = vmatpush1.xpose.msra.mxu0 %v339
        %373 = vmatprep.subr.mxu0 0.0
        %374 = vmatpush2.xpose.msra.mxu0 0.0
        %375 = vmatprep.subr.mxu0 0.0
        %376 = vmatpush2.xpose.msra.mxu0 0.0
        %377 = vmatprep.subr.mxu0 0.0
        %378 = vmatpush2.xpose.msra.mxu0 0.0
        %379 = vmatprep.subr.mxu0 0.0
        %380 = vmatpush2.xpose.msra.mxu0 0.0
        %381 = vmatprep.subr.mxu0 0.0
        %382 = vmatpush2.xpose.msra.mxu0 0.0
        %383 = vmatprep.subr.mxu0 0.0
        %384 = vmatpush2.xpose.msra.mxu0 0.0
        %385 = vmatprep.subr.mxu0 0.0
        %386 = vmatpush2.xpose.msra.mxu0 0.0
        %387 = vmatprep.subr.mxu0 0.0
        %388 = vmatpush2.xpose.msra.mxu0 0.0
        %389 = vmatprep.subr.mxu0 0.0
        %390 = vmatpush2.xpose.msra.mxu0 0.0
        %391 = vmatprep.subr.mxu0 0.0
        %392 = vmatpush2.xpose.msra.mxu0 0.0
        %393 = vmatprep.subr.mxu0 0.0
        %394 = vmatpush2.xpose.msra.mxu0 0.0
        %395 = vmatprep.subr.mxu0 0.0
        %396 = vmatpush2.xpose.msra.mxu0 0.0
        %397 = vmatprep.subr.mxu0 0.0
        %398 = vmatpush2.xpose.msra.mxu0 0.0
        %399 = vmatprep.subr.mxu0 0.0
        %400 = vmatpush2.xpose.msra.mxu0 0.0
        %401 = vmatprep.subr.mxu0 0.0
        %402 = vmatpush2.xpose.msra.mxu0 0.0
        %403 = vmatprep.subr.mxu0 0.0
        %404 = vmatpush2.xpose.msra.mxu0 0.0
        %405 = vmatprep.mubr.f32.mxu0 0.0
        %406 = vmatmul.mubr.f32.gmra.mxu0 %v336
        %v407 = vpop.f32.mrf.mxu0
        %v408 = vadd.f32 0.0, %v407
        %v409 = vpop.f32.mrf.mxu0
        %410 = vdwg.mxu0
        %v412 = vsel %vm334, %v331, 0
        %v415 = vsel %vm334, %v333, 0
        %417 = vmatprep.subr.mxu0 0.0
        %418 = vmatpush1.xpose.msra.mxu0 0.0
        %419 = vmatprep.subr.mxu0 0.0
        %420 = vmatpush1.xpose.msra.mxu0 0.0
        %421 = vmatprep.subr.mxu0 0.0
        %422 = vmatpush1.xpose.msra.mxu0 0.0
        %423 = vmatprep.subr.mxu0 0.0
        %424 = vmatpush1.xpose.msra.mxu0 0.0
        %425 = vmatprep.subr.mxu0 0.0
        %426 = vmatpush1.xpose.msra.mxu0 0.0
        %427 = vmatprep.subr.mxu0 0.0
        %428 = vmatpush1.xpose.msra.mxu0 0.0
        %429 = vmatprep.subr.mxu0 0.0
        %430 = vmatpush1.xpose.msra.mxu0 0.0
        %431 = vmatprep.subr.mxu0 0.0
        %432 = vmatpush1.xpose.msra.mxu0 0.0
        %433 = vmatprep.subr.mxu0 0.0
        %434 = vmatpush1.xpose.msra.mxu0 0.0
        %435 = vmatprep.subr.mxu0 0.0
        %436 = vmatpush1.xpose.msra.mxu0 0.0
        %437 = vmatprep.subr.mxu0 0.0
        %438 = vmatpush1.xpose.msra.mxu0 0.0
        %439 = vmatprep.subr.mxu0 0.0
        %440 = vmatpush1.xpose.msra.mxu0 0.0
        %441 = vmatprep.subr.mxu0 0.0
        %442 = vmatpush1.xpose.msra.mxu0 0.0
        %443 = vmatprep.subr.mxu0 0.0
        %444 = vmatpush1.xpose.msra.mxu0 0.0
        %445 = vmatprep.subr.mxu0 0.0
        %446 = vmatpush1.xpose.msra.mxu0 0.0
        %447 = vmatprep.subr.mxu0 0.0
        %448 = vmatpush1.xpose.msra.mxu0 %v415
        %449 = vmatprep.subr.mxu0 0.0
        %450 = vmatpush2.xpose.msra.mxu0 0.0
        %451 = vmatprep.subr.mxu0 0.0
        %452 = vmatpush2.xpose.msra.mxu0 0.0
        %453 = vmatprep.subr.mxu0 0.0
        %454 = vmatpush2.xpose.msra.mxu0 0.0
        %455 = vmatprep.subr.mxu0 0.0
        %456 = vmatpush2.xpose.msra.mxu0 0.0
        %457 = vmatprep.subr.mxu0 0.0
        %458 = vmatpush2.xpose.msra.mxu0 0.0
        %459 = vmatprep.subr.mxu0 0.0
        %460 = vmatpush2.xpose.msra.mxu0 0.0
        %461 = vmatprep.subr.mxu0 0.0
        %462 = vmatpush2.xpose.msra.mxu0 0.0
        %463 = vmatprep.subr.mxu0 0.0
        %464 = vmatpush2.xpose.msra.mxu0 0.0
        %465 = vmatprep.subr.mxu0 0.0
        %466 = vmatpush2.xpose.msra.mxu0 0.0
        %467 = vmatprep.subr.mxu0 0.0
        %468 = vmatpush2.xpose.msra.mxu0 0.0
        %469 = vmatprep.subr.mxu0 0.0
        %470 = vmatpush2.xpose.msra.mxu0 0.0
        %471 = vmatprep.subr.mxu0 0.0
        %472 = vmatpush2.xpose.msra.mxu0 0.0
        %473 = vmatprep.subr.mxu0 0.0
        %474 = vmatpush2.xpose.msra.mxu0 0.0
        %475 = vmatprep.subr.mxu0 0.0
        %476 = vmatpush2.xpose.msra.mxu0 0.0
        %477 = vmatprep.subr.mxu0 0.0
        %478 = vmatpush2.xpose.msra.mxu0 0.0
        %479 = vmatprep.subr.mxu0 0.0
        %480 = vmatpush2.xpose.msra.mxu0 0.0
        %481 = vmatprep.mubr.f32.mxu0 0.0
        %482 = vmatmul.mubr.f32.gmra.mxu0 %v412
        %v483 = vpop.f32.mrf.mxu0
        %v484 = vadd.f32 0.0, %v483
        %v485 = vpop.f32.mrf.mxu0
        %486 = vdwg.mxu0
        %v487 = vld [vmem:[%s283] sm:$0xff]
        %v488 = vld [vmem:[%s283 + $0x8] sm:$0xff]
        %vm489 = vcmask 64512
        %v490 = vsel %vm489, %v408, -inf
        %491 = vmax.xlane.f32.xlu0 %v490
        %v492 = vpop.xlane.xlu0 %491
        %v493 = vsel %vm489, %v484, -inf
        %494 = vmax.xlane.f32.xlu0 %v493
        %v495 = vpop.xlane.xlu0 %494
        %v496 = vsub.f32 %v408, %v492
        %v497 = vsub.f32 %v484, %v495
        %v498 = vmul.f32 %v496, 1.442695
        %v499 = vpow.pop %v498
        %v500 = vmul.f32 %v497, 1.442695
        %v501 = vpow.pop %v500
        %v502 = vsel %vm489, %v499, 0.0
        %503 = vadd.xlane.f32.xlu0 %v502
        %v504 = vpop.xlane.xlu0 %503
        %v505 = vsel %vm489, %v501, 0.0
        %506 = vadd.xlane.f32.xlu0 %v505
        %v507 = vpop.xlane.xlu0 %506
        %v508 = vrcp.pop %v504
        %v509 = vrcp.pop %v507
        %v510 = vmul.f32 %v504, %v508
        %v511 = vmul.f32 %v507, %v509
        %v512 = vsub.f32 2.0, %v510
        %v513 = vsub.f32 2.0, %v511
        %v514 = vmul.f32 %v508, %v512
        %v515 = vmul.f32 %v509, %v513
        %v516 = vmul.f32 %v499, %v514
        %v517 = vmul.f32 %v501, %v515
        %518 = vst.msk [vmem:[%s322] sm:$0xff] %vm489, %v516
        %519 = vst.msk [vmem:[%s322 + $0x8] sm:$0xff] %vm489, %v517
        %v521 = vsel %vm489, %v516, 0
        %523 = vmatprep.subr.mxu0 0.0
        %524 = vmatpush1.msra.mxu0 0.0
        %525 = vmatprep.subr.mxu0 0.0
        %526 = vmatpush1.msra.mxu0 0.0
        %527 = vmatprep.subr.mxu0 0.0
        %528 = vmatpush1.msra.mxu0 0.0
        %529 = vmatprep.subr.mxu0 0.0
        %530 = vmatpush1.msra.mxu0 0.0
        %531 = vmatprep.subr.mxu0 0.0
        %532 = vmatpush1.msra.mxu0 0.0
        %533 = vmatprep.subr.mxu0 0.0
        %534 = vmatpush1.msra.mxu0 0.0
        %535 = vmatprep.subr.mxu0 0.0
        %536 = vmatpush1.msra.mxu0 0.0
        %537 = vmatprep.subr.mxu0 0.0
        %538 = vmatpush1.msra.mxu0 0.0
        %539 = vmatprep.subr.mxu0 0.0
        %540 = vmatpush1.msra.mxu0 0.0
        %541 = vmatprep.subr.mxu0 0.0
        %542 = vmatpush1.msra.mxu0 0.0
        %543 = vmatprep.subr.mxu0 0.0
        %544 = vmatpush1.msra.mxu0 0.0
        %545 = vmatprep.subr.mxu0 0.0
        %546 = vmatpush1.msra.mxu0 0.0
        %547 = vmatprep.subr.mxu0 0.0
        %548 = vmatpush1.msra.mxu0 0.0
        %549 = vmatprep.subr.mxu0 0.0
        %550 = vmatpush1.msra.mxu0 0.0
        %551 = vmatprep.subr.mxu0 0.0
        %552 = vmatpush1.msra.mxu0 0.0
        %553 = vmatprep.subr.mxu0 0.0
        %554 = vmatpush1.msra.mxu0 %v487
        %555 = vmatprep.subr.mxu0 0.0
        %556 = vmatpush2.msra.mxu0 0.0
        %557 = vmatprep.subr.mxu0 0.0
        %558 = vmatpush2.msra.mxu0 0.0
        %559 = vmatprep.subr.mxu0 0.0
        %560 = vmatpush2.msra.mxu0 0.0
        %561 = vmatprep.subr.mxu0 0.0
        %562 = vmatpush2.msra.mxu0 0.0
        %563 = vmatprep.subr.mxu0 0.0
        %564 = vmatpush2.msra.mxu0 0.0
        %565 = vmatprep.subr.mxu0 0.0
        %566 = vmatpush2.msra.mxu0 0.0
        %567 = vmatprep.subr.mxu0 0.0
        %568 = vmatpush2.msra.mxu0 0.0
        %569 = vmatprep.subr.mxu0 0.0
        %570 = vmatpush2.msra.mxu0 0.0
        %571 = vmatprep.subr.mxu0 0.0
        %572 = vmatpush2.msra.mxu0 0.0
        %573 = vmatprep.subr.mxu0 0.0
        %574 = vmatpush2.msra.mxu0 0.0
        %575 = vmatprep.subr.mxu0 0.0
        %576 = vmatpush2.msra.mxu0 0.0
        %577 = vmatprep.subr.mxu0 0.0
        %578 = vmatpush2.msra.mxu0 0.0
        %579 = vmatprep.subr.mxu0 0.0
        %580 = vmatpush2.msra.mxu0 0.0
        %581 = vmatprep.subr.mxu0 0.0
        %582 = vmatpush2.msra.mxu0 0.0
        %583 = vmatprep.subr.mxu0 0.0
        %584 = vmatpush2.msra.mxu0 0.0
        %585 = vmatprep.subr.mxu0 0.0
        %586 = vmatpush2.msra.mxu0 0.0
        %587 = vmatprep.mubr.f32.mxu0 0.0
        %588 = vmatmul.mubr.f32.gmra.mxu0 %v521
        %v589 = vpop.f32.mrf.mxu0
        %v590 = vadd.f32 0.0, %v589
        %v591 = vpop.f32.mrf.mxu0
        %592 = vdwg.mxu0
        %v594 = vsel %vm489, %v517, 0
        %596 = vmatprep.subr.mxu0 0.0
        %597 = vmatpush1.msra.mxu0 0.0
        %598 = vmatprep.subr.mxu0 0.0
        %599 = vmatpush1.msra.mxu0 0.0
        %600 = vmatprep.subr.mxu0 0.0
        %601 = vmatpush1.msra.mxu0 0.0
        %602 = vmatprep.subr.mxu0 0.0
        %603 = vmatpush1.msra.mxu0 0.0
        %604 = vmatprep.subr.mxu0 0.0
        %605 = vmatpush1.msra.mxu0 0.0
        %606 = vmatprep.subr.mxu0 0.0
        %607 = vmatpush1.msra.mxu0 0.0
        %608 = vmatprep.subr.mxu0 0.0
        %609 = vmatpush1.msra.mxu0 0.0
        %610 = vmatprep.subr.mxu0 0.0
        %611 = vmatpush1.msra.mxu0 0.0
        %612 = vmatprep.subr.mxu0 0.0
        %613 = vmatpush1.msra.mxu0 0.0
        %614 = vmatprep.subr.mxu0 0.0
        %615 = vmatpush1.msra.mxu0 0.0
        %616 = vmatprep.subr.mxu0 0.0
        %617 = vmatpush1.msra.mxu0 0.0
        %618 = vmatprep.subr.mxu0 0.0
        %619 = vmatpush1.msra.mxu0 0.0
        %620 = vmatprep.subr.mxu0 0.0
        %621 = vmatpush1.msra.mxu0 0.0
        %622 = vmatprep.subr.mxu0 0.0
        %623 = vmatpush1.msra.mxu0 0.0
        %624 = vmatprep.subr.mxu0 0.0
        %625 = vmatpush1.msra.mxu0 0.0
        %626 = vmatprep.subr.mxu0 0.0
        %627 = vmatpush1.msra.mxu0 %v488
        %628 = vmatprep.subr.mxu0 0.0
        %629 = vmatpush2.msra.mxu0 0.0
        %630 = vmatprep.subr.mxu0 0.0
        %631 = vmatpush2.msra.mxu0 0.0
        %632 = vmatprep.subr.mxu0 0.0
        %633 = vmatpush2.msra.mxu0 0.0
        %634 = vmatprep.subr.mxu0 0.0
        %635 = vmatpush2.msra.mxu0 0.0
        %636 = vmatprep.subr.mxu0 0.0
        %637 = vmatpush2.msra.mxu0 0.0
        %638 = vmatprep.subr.mxu0 0.0
        %639 = vmatpush2.msra.mxu0 0.0
        %640 = vmatprep.subr.mxu0 0.0
        %641 = vmatpush2.msra.mxu0 0.0
        %642 = vmatprep.subr.mxu0 0.0
        %643 = vmatpush2.msra.mxu0 0.0
        %644 = vmatprep.subr.mxu0 0.0
        %645 = vmatpush2.msra.mxu0 0.0
        %646 = vmatprep.subr.mxu0 0.0
        %647 = vmatpush2.msra.mxu0 0.0
        %648 = vmatprep.subr.mxu0 0.0
        %649 = vmatpush2.msra.mxu0 0.0
        %650 = vmatprep.subr.mxu0 0.0
        %651 = vmatpush2.msra.mxu0 0.0
        %652 = vmatprep.subr.mxu0 0.0
        %653 = vmatpush2.msra.mxu0 0.0
        %654 = vmatprep.subr.mxu0 0.0
        %655 = vmatpush2.msra.mxu0 0.0
        %656 = vmatprep.subr.mxu0 0.0
        %657 = vmatpush2.msra.mxu0 0.0
        %658 = vmatprep.subr.mxu0 0.0
        %659 = vmatpush2.msra.mxu0 0.0
        %660 = vmatprep.mubr.f32.mxu0 0.0
        %661 = vmatmul.mubr.f32.gmra.mxu0 %v594
        %v662 = vpop.f32.mrf.mxu0
        %v663 = vadd.f32 0.0, %v662
        %v664 = vpop.f32.mrf.mxu0
        %665 = vdwg.mxu0
        %666 = vst.msk [vmem:[%s315] sm:$0xff] %vm334, %v590
        %667 = vst.msk [vmem:[%s315 + $0x8] sm:$0xff] %vm334, %v663
        %s668 = sand.u32 %s130, 1
        %s669 = scalar_lea.sflag [#allocation4], %s668
        %s670 = sand.u32 %s130, 1
        %s671 = smul.addr %s670, 16
        %s672 = scalar_lea.vmem [#allocation8], %s671
        %s673 = sand.u32 %s158, 1
        %s674 = scalar_lea.sflag [#allocation10], %s673
        %s675 = sand.u32 %s158, 1
        %s676 = smul.addr %s675, 16
        %s677 = scalar_lea.vmem [#allocation9], %s676
        // Predicated region
        $region45: #{tpu_custom_call.1} parent=31 // pred_check
          %p678 = pneg %p140
        $region46: #{tpu_custom_call.1} parent=31 // pred_check_branch
          %680 = sbr.rel (%p678) target = $region48
        $region47: #{tpu_custom_call.1} parent=31 // pred_region
          %s681 = smul.u32 2, %s32
          %s683 = ssub.s32 256, 256
          %684 = vsyncadd %s669, %s683
          %s685 = sadd.s32 %s33, %s681
          %s686 = smul.addr %s685, 128
          %s687 = scalar_lea.hbm %s3, %s686
          %s688 = sshll.u32 %s672, 4
          %s689 = int_to_ptr.vmem [resolvable:$true] %s688
          %694 = dma.vmem_to_hbm [thread:$0]  %s689, 256, %s687, %s669, 128, 128, 8
        $region48: #{tpu_custom_call.1} parent=31 // pred_fallthru
          _
        // Predicated region
        $region49: #{tpu_custom_call.1} parent=31 // pred_check
          %p695 = pneg %p168
        $region50: #{tpu_custom_call.1} parent=31 // pred_check_branch
          %697 = sbr.rel (%p695) target = $region52
        $region51: #{tpu_custom_call.1} parent=31 // pred_region
          %s698 = smul.u32 2, %s32
          %s700 = ssub.s32 256, 256
          %701 = vsyncadd %s674, %s700
          %s702 = sadd.s32 %s33, %s698
          %s703 = smul.addr %s702, 128
          %s704 = scalar_lea.hbm %s4, %s703
          %s705 = sshll.u32 %s677, 4
          %s706 = int_to_ptr.vmem [resolvable:$true] %s705
          %711 = dma.vmem_to_hbm [thread:$0]  %s706, 256, %s704, %s674, 128, 128, 8
        $region52: #{tpu_custom_call.1} parent=31 // pred_fallthru
          _
      $region32: #{tpu_custom_call.1} parent=5 // pred_fallthru
        _
      %p712 = scmp.le.s32.totalorder 2, %s23
      // Predicated region
      $region53: #{tpu_custom_call.1} parent=5 // pred_check
        %p713 = pneg %p712
      $region54: #{tpu_custom_call.1} parent=5 // pred_check_branch
        %715 = sbr.rel (%p713) target = $region56
      $region55: #{tpu_custom_call.1} parent=5 // pred_region
        %s716 = ssub.s32 %s23, 2
        // Predicated region
        $region57: #{tpu_custom_call.1} parent=55 // pred_check
          %p717 = pneg %p146
        $region58: #{tpu_custom_call.1} parent=55 // pred_check_branch
          %719 = sbr.rel (%p717) target = $region60
        $region59: #{tpu_custom_call.1} parent=55 // pred_region
          %s720 = sand.u32 %s131, 1
          %s721 = scalar_lea.sflag [#allocation4], %s720
          %s722 = sand.u32 %s131, 1
          %s723 = smul.addr %s722, 16
          %s724 = scalar_lea.vmem [#allocation8], %s723
          %725 = dma.done %s721, 256
        $region60: #{tpu_custom_call.1} parent=55 // pred_fallthru
          _
        // Predicated region
        $region61: #{tpu_custom_call.1} parent=55 // pred_check
          %p726 = pneg %p174
        $region62: #{tpu_custom_call.1} parent=55 // pred_check_branch
          %728 = sbr.rel (%p726) target = $region64
        $region63: #{tpu_custom_call.1} parent=55 // pred_region
          %s729 = sand.u32 %s159, 1
          %s730 = scalar_lea.sflag [#allocation10], %s729
          %s731 = sand.u32 %s159, 1
          %s732 = smul.addr %s731, 16
          %s733 = scalar_lea.vmem [#allocation9], %s732
          %734 = dma.done %s730, 256
        $region64: #{tpu_custom_call.1} parent=55 // pred_fallthru
          _
      $region56: #{tpu_custom_call.1} parent=5 // pred_fallthru
        _
    $region6: #{tpu_custom_call.1} parent=1 // loop_footer
      %s27 = sadd.s32 1, %s23
    $region7: #{tpu_custom_call.1} parent=1 // loop_footer_branch
      %22 = sbr.rel target = $region3
    $region8: #{tpu_custom_call.1} parent=1 // loop_exit
      _
    %735 = vsyncpa [#allocation3], 1
    %s736 = scalar_lea.sflag [#allocation3], 1
    %737 = vsyncpa %s736, 1
    %738 = vsyncpa [#allocation6], 1
    %s739 = scalar_lea.sflag [#allocation6], 1
    %740 = vsyncpa %s739, 1
    %741 = vsyncpa [#allocation4], 1
    %s742 = scalar_lea.sflag [#allocation4], 1
    %743 = vsyncpa %s742, 1
    %744 = vsyncpa [#allocation10], 1
    %s745 = scalar_lea.sflag [#allocation10], 1
    %746 = vsyncpa %s745, 1

</llo_original>
